<compile_context>
chip_gen: v5e
topology: v5e:2x2
jax: 0.10.0
libtpu: 0.0.40
codegen_flags: <defaults>
</compile_context>

<pallas_src>
from functools import partial
import math

import jax
import jax.numpy as jnp
from jax.experimental import pallas as pl
from jax.experimental.pallas import tpu as pltpu

_LANE = 128             # TPU lane width
_MAX_BLOCK_ROWS = 4096  # 4096 x 128 f32 = 2 MiB per VMEM buffer (mult. of 32)


def _pact_kernel(scalar_ref, x_ref, o_ref, *, scale):
    """Element-wise PACT quantization on one (block_rows, 128) tile.

    scalar_ref (SMEM, f32[3]) = [alpha, upper, iq] with
      upper = min(alpha, 6)   -- folds torch.clip(x, max=6) into the clamp
      iq    = alpha / scale   -- folds the trailing /scale * alpha into one mul
    """
    alpha = scalar_ref[0]
    upper = scalar_ref[1]
    iq = scalar_ref[2]

    x = x_ref[...].astype(jnp.float32)
    clipped = jnp.clip(x, 0.0, upper)        # clamp(min(x, 6), 0, alpha)
    normalized = clipped / alpha             # exactly in [0, 1] -> inner clamp dropped
    y_q = jnp.round(normalized * scale)      # integer levels 0..scale (round-half-even)
    o_ref[...] = (y_q * iq).astype(o_ref.dtype)   # single full-lane store


def pact_forward(x, alpha, *, p=4):
    """Pallas implementation of PACT.forward (the module forces p = 4)."""
    orig_shape = x.shape
    dtype = x.dtype
    total = math.prod(orig_shape)
    scale = float(2 ** p - 1)

    # Lane-dense 2-D view: (rows, 128).  Only the tail is padded (<=127 elems,
    # skipped when already aligned); ragged grid blocks are handled by Pallas.
    pad_amt = (-total) % _LANE
    x_flat = x.reshape(-1)                   # free (row-major contiguous)
    if pad_amt:
        x_flat = jnp.pad(x_flat, (0, pad_amt))
    rows = (total + pad_amt) // _LANE
    x2d = x_flat.reshape(rows, _LANE)

    if rows <= _MAX_BLOCK_ROWS:
        block_rows = rows                    # full-dim block: always layout-legal
    else:
        block_rows = _MAX_BLOCK_ROWS         # mult. of 32: legal for f32/bf16/int8
    num_blocks = pl.cdiv(rows, block_rows)

    alpha_f = jnp.asarray(alpha, dtype=jnp.float32)
    scalars = jnp.stack([alpha_f,
                         jnp.minimum(alpha_f, jnp.float32(6.0)),
                         alpha_f / jnp.float32(scale)])

    itemsize = jnp.dtype(dtype).itemsize
    out2d = pl.pallas_call(
        partial(_pact_kernel, scale=scale),
        grid=(num_blocks,),
        in_specs=[
            pl.BlockSpec(memory_space=pltpu.MemorySpace.SMEM),     # [alpha, upper, iq]
            pl.BlockSpec((block_rows, _LANE), lambda i: (i, 0)),   # x tile
        ],
        out_specs=pl.BlockSpec((block_rows, _LANE), lambda i: (i, 0)),
        out_shape=jax.ShapeDtypeStruct((rows, _LANE), dtype),
        compiler_params=pltpu.CompilerParams(
            dimension_semantics=("parallel",)),
        cost_estimate=pl.CostEstimate(
            flops=7 * rows * _LANE,
            transcendentals=rows * _LANE,
            bytes_accessed=2 * rows * _LANE * itemsize + 12),
    )(scalars, x2d)

    out_flat = out2d.reshape(-1)
    if pad_amt:
        out_flat = out_flat[:total]
    return out_flat.reshape(orig_shape)


if __name__ == "__main__":
    key = jax.random.PRNGKey(0)
    N, C, H, W = 2, 4, 16, 16
    # spread values across all interesting regimes: < 0, (0, alpha), (alpha, 6), > 6
    x = 8.0 * jax.random.normal(key, (N, C, H, W), dtype=jnp.float32)
    alpha = 4.0
    p = 4

    out = jax.block_until_ready(pact_forward(x, alpha, p=p))

    # pure-JAX reference mirroring the PyTorch op order
    scale = float(2 ** p - 1)
    ref = jnp.minimum(x, 6.0)
    ref = jnp.clip(ref, 0.0, alpha)
    ref = ref / alpha
    ref = jnp.clip(ref, 0.0, 1.0)
    ref = jnp.round(ref * scale) / scale
    ref = ref * alpha

    assert out.shape == x.shape, out.shape
    assert out.dtype == x.dtype, out.dtype
    assert jnp.allclose(out, ref, atol=1e-5), float(jnp.max(jnp.abs(out - ref)))
    print("KERNEL_OK")
</pallas_src>

<mosaic_0001>
module attributes {stable_mosaic.version = 11 : i64} {
  func.func @_pact_kernel(%arg0: i32, %arg1: memref<3xf32, #tpu.memory_space<smem>>, %arg2: memref<16x128xf32, #tpu.memory_space<vmem>>, %arg3: memref<16x128xf32, #tpu.memory_space<vmem>>) attributes {dimension_semantics = [#tpu.dimension_semantics<parallel>], iteration_bounds = array<i64: 1>, scalar_prefetch = 0 : i64, scratch_operands = 0 : i64, tpu.core_type = #tpu.core_type<tc>, window_params = [{transform_indices = @transform_0, window_bounds = array<i64: 3>}, {transform_indices = @transform_1, window_bounds = array<i64: 16, 128>}, {transform_indices = @transform_2, window_bounds = array<i64: 16, 128>}]} {
    %c0 = arith.constant 0 : index
    %0 = memref.load %arg1[%c0] : memref<3xf32, #tpu.memory_space<smem>>
    %c1 = arith.constant 1 : index
    %1 = memref.load %arg1[%c1] : memref<3xf32, #tpu.memory_space<smem>>
    %c2 = arith.constant 2 : index
    %2 = memref.load %arg1[%c2] : memref<3xf32, #tpu.memory_space<smem>>
    %c0_0 = arith.constant 0 : index
    %c0_1 = arith.constant 0 : index
    %3 = vector.load %arg2[%c0_0, %c0_1] : memref<16x128xf32, #tpu.memory_space<vmem>>, vector<16x128xf32>
    %cst = arith.constant 0.000000e+00 : f32
    %4 = vector.broadcast %cst : f32 to vector<16x128xf32>
    %5 = arith.maximumf %4, %3 : vector<16x128xf32>
    %6 = vector.broadcast %1 : f32 to vector<16x128xf32>
    %7 = arith.minimumf %6, %5 : vector<16x128xf32>
    %8 = vector.broadcast %0 : f32 to vector<16x128xf32>
    %9 = arith.divf %7, %8 : vector<16x128xf32>
    %cst_2 = arith.constant 1.500000e+01 : f32
    %10 = vector.broadcast %cst_2 : f32 to vector<16x128xf32>
    %11 = arith.mulf %9, %10 : vector<16x128xf32>
    %12 = math.roundeven %11 : vector<16x128xf32>
    %13 = vector.broadcast %2 : f32 to vector<16x128xf32>
    %14 = arith.mulf %12, %13 : vector<16x128xf32>
    %c0_3 = arith.constant 0 : index
    %c0_4 = arith.constant 0 : index
    %15 = vector.load %arg3[%c0_3, %c0_4] : memref<16x128xf32, #tpu.memory_space<vmem>>, vector<16x128xf32>
    tpu.vector_store %arg3[%c0_3, %c0_4], %14 {strides = array<i32>} : memref<16x128xf32, #tpu.memory_space<vmem>>, vector<16x128xf32>,
    return
  }
  func.func @transform_0(%arg0: i32) -> i32 {
    %c0_i32 = arith.constant 0 : i32
    %c0_i32_0 = arith.constant 0 : i32
    return %c0_i32 : i32
  }
  func.func @transform_1(%arg0: i32) -> (i32, i32) {
    %c0_i32 = arith.constant 0 : i32
    %c0_i32_0 = arith.constant 0 : i32
    return %arg0, %c0_i32 : i32, i32
  }
  func.func @transform_2(%arg0: i32) -> (i32, i32) {
    %c0_i32 = arith.constant 0 : i32
    %c0_i32_0 = arith.constant 0 : i32
    return %arg0, %c0_i32 : i32, i32
  }
}

</mosaic_0001>

<llo_original>
// kernel: tpu_custom_call.1
$region0: #{tpu_custom_call.1}
  #allocation0 [shape = 'u32[]', space=smem, size = 0x4, offset = 0x4, fixed_abs, tag = 'smem constant byte address 0x4 - core index']
  #allocation1 [shape = 'u32[72,128]{1,0:T(1,128)}', space=vmem, size = 0x9000, scoped, tag = 'internal scratch']
  %s0 = inlined_call_operand.hbm [shape: f32[3], index: 0, kind: input, shape index: {}]
  %s1 = inlined_call_operand.hbm [shape: f32[16,128], index: 1, kind: input, shape index: {}]
  %s2 = inlined_call_operand.hbm [shape: f32[16,128], index: 2, kind: output, shape index: {}]
  %s3 = sld [smem:[#allocation0]]
  $region26: #{tpu_custom_call.1} parent=0
    _
  %s5 = ssub.s32 1, %s3
  %s6 = scalar_select 0, %s5, %s3
  $region1: #{tpu_custom_call.1} parent=0
    #allocation2 [shape = 'u8[512]{0}', space=smem, size = 0x200, scoped, tag = 'input window, operand 0, single buffered']
    #allocation3 [shape = 's32[1]{0}', space=sflag, size = 0x4, scoped, tag = 'scoped memory for tpu_custom_call.1']
    #allocation4 [shape = 's32[1]{0}', space=sflag, size = 0x4, scoped, tag = 'scoped memory for tpu_custom_call.1']
    #allocation5 [shape = 's32[1]{0}', space=sflag, size = 0x4, scoped, tag = 'scoped memory for tpu_custom_call.1']
    #allocation6 [shape = 'u8[8192]{0}', space=vmem, size = 0x2000, scoped, tag = 'input window, operand 1, single buffered']
    #allocation7 [shape = 'u8[8192]{0}', space=vmem, size = 0x2000, scoped, tag = 'output window, operand 0, single buffered']
    %7 = vsyncpa [#allocation5], 0
    %8 = vsyncpa [#allocation3], 0
    %9 = vsyncpa [#allocation4], 0
    // Predicated region
    $region2: #{tpu_custom_call.1} parent=1 // pred_check
      _
    $region3: #{tpu_custom_call.1} parent=1 // pred_check_branch
      %11 = sbr.rel (0) target = $region5
    $region4: #{tpu_custom_call.1} parent=1 // pred_region
      %13 = vsyncadd [#allocation5], 0
      %s15 = sshll.u32 %s0, 4
      %s16 = int_to_ptr.hbm [resolvable:$true] %s15
      %18 = dma.hbm_to_smem %s16, 16, [#allocation2], [#allocation5]
    $region5: #{tpu_custom_call.1} parent=1 // pred_fallthru
      _
    // Predicated region
    $region6: #{tpu_custom_call.1} parent=1 // pred_check
      _
    $region7: #{tpu_custom_call.1} parent=1 // pred_check_branch
      %20 = sbr.rel (0) target = $region9
    $region8: #{tpu_custom_call.1} parent=1 // pred_region
      %22 = vsyncadd [#allocation3], 0
      %s23 = sshll.u32 %s1, 4
      %s24 = int_to_ptr.hbm [resolvable:$true] %s23
      %s25 = sshll.u32 [#allocation6], 4
      %s26 = int_to_ptr.vmem [resolvable:$true] %s25
      %31 = dma.hbm_to_vmem [thread:$0]  %s24, 256, %s26, [#allocation3], 128, 128, 8
    $region9: #{tpu_custom_call.1} parent=1 // pred_fallthru
      _
    // Predicated region
    $region10: #{tpu_custom_call.1} parent=1 // pred_check
      _
    $region11: #{tpu_custom_call.1} parent=1 // pred_check_branch
      %33 = sbr.rel (0) target = $region13
    $region12: #{tpu_custom_call.1} parent=1 // pred_region
      %35 = dma.done [#allocation5], 16
    $region13: #{tpu_custom_call.1} parent=1 // pred_fallthru
      _
    // Predicated region
    $region14: #{tpu_custom_call.1} parent=1 // pred_check
      _
    $region15: #{tpu_custom_call.1} parent=1 // pred_check_branch
      %37 = sbr.rel (0) target = $region17
    $region16: #{tpu_custom_call.1} parent=1 // pred_region
      %39 = dma.done [#allocation3], 256
    $region17: #{tpu_custom_call.1} parent=1 // pred_fallthru
      _
    %40 = sfence
    %s41 = sld [smem:[#allocation2]]
    %s42 = sld [smem:[#allocation2 + $0x1]]
    %s43 = sld [smem:[#allocation2 + $0x2]]
    %v44 = vld [vmem:[#allocation6] sm:$0xff]
    %v45 = vld [vmem:[#allocation6 + $0x8] sm:$0xff]
    %v46 = vmax.f32 %v44, 0.0
    %v47 = vmax.f32 %v45, 0.0
    %v48 = vstv %s42
    %v49 = vmin.f32 %v48, %v46
    %v50 = vmin.f32 %v48, %v47
    %v51 = vstv %s41
    %v52 = vrcp.pop %v51
    %v53 = vmul.f32 %v51, %v52
    %v54 = vsub.f32 1.0, %v53
    %v55 = vmul.f32 %v52, %v54
    %v56 = vadd.f32 %v52, %v55
    %vm57 = vweird.f32 %v51
    %vm58 = vweird.f32 %v52
    %vm59 = vmor %vm57, %vm58
    %v60 = vsel %vm59, %v52, %v56
    %v61 = vand.u32 2147483647, %v51
    %vm62 = vcmp.eq.f32.partialorder %v61, 8.507059e+37
    %v63 = vand.u32 %v51, 2147483648
    %v64 = vor.u32 1.1754944e-38, %v63
    %v65 = vsel %vm62, %v64, %v60
    %v66 = vmul.f32 %v49, %v65
    %v67 = vmul.f32 %v50, %v65
    %v68 = vmul.f32 %v66, 15.0
    %v69 = vmul.f32 %v67, 15.0
    %v70 = vround.ne.pseudo %v68
    %v71 = vround.ne.pseudo %v69
    %v72 = vstv %s43
    %v73 = vmul.f32 %v70, %v72
    %v74 = vmul.f32 %v71, %v72
    %75 = vst [vmem:[#allocation7] sm:$0xff] %v73
    %76 = vst [vmem:[#allocation7 + $0x8] sm:$0xff] %v74
    // Predicated region
    $region18: #{tpu_custom_call.1} parent=1 // pred_check
      _
    $region19: #{tpu_custom_call.1} parent=1 // pred_check_branch
      %78 = sbr.rel (0) target = $region21
    $region20: #{tpu_custom_call.1} parent=1 // pred_region
      %80 = vsyncadd [#allocation4], 0
      %s81 = sshll.u32 [#allocation7], 4
      %s82 = int_to_ptr.vmem [resolvable:$true] %s81
      %s83 = sshll.u32 %s2, 4
      %s84 = int_to_ptr.hbm [resolvable:$true] %s83
      %89 = dma.vmem_to_hbm [thread:$0]  %s82, 256, %s84, [#allocation4], 128, 128, 8
    $region21: #{tpu_custom_call.1} parent=1 // pred_fallthru
      _
    // Predicated region
    $region22: #{tpu_custom_call.1} parent=1 // pred_check
      _
    $region23: #{tpu_custom_call.1} parent=1 // pred_check_branch
      %91 = sbr.rel (0) target = $region25
    $region24: #{tpu_custom_call.1} parent=1 // pred_region
      %93 = dma.done [#allocation4], 256
    $region25: #{tpu_custom_call.1} parent=1 // pred_fallthru
      _
    %94 = vsyncpa [#allocation3], 1
    %95 = vsyncpa [#allocation4], 1
    %96 = vsyncpa [#allocation5], 1

</llo_original>
